<compile_context>
chip_gen: v7x
topology: tpu7x:2x2x1
jax: 0.10.0
libtpu: 0.0.40
codegen_flags: <defaults>
</compile_context>

<pallas_src>
import functools

import jax
import jax.numpy as jnp
from jax.experimental import pallas as pl
from jax.experimental.pallas import tpu as pltpu


# ---------------------------------------------------------------------------
# Hardware-aware budgets
# ---------------------------------------------------------------------------

def _round_up(x: int, m: int) -> int:
    return (x + m - 1) // m * m


@functools.lru_cache(maxsize=None)
def _hw_params():
    """Return (vmem_working_set_budget, vmem_limit_cap, dual_core).

    v7x-class parts expose ~64 MiB VMEM per TensorCore and have 2 TensorCores
    per chip; v5e/v6e expose 128 MiB and have a single TensorCore.  We use the
    reported VMEM capacity as the generation proxy.
    """
    try:
        vmem = int(pltpu.get_tpu_info().vmem_capacity_bytes)
        known = True
    except Exception:  # API missing / not on TPU: be conservative (v7x-sized).
        vmem = 64 * 1024 * 1024
        known = False

    if vmem <= 80 * 1024 * 1024:
        # v7x-class: 64 MiB per TensorCore -> leave headroom for compiler scratch.
        return 40 * 1024 * 1024, 48 * 1024 * 1024, known
    # v5e / v6e: 128 MiB physical VMEM, single TensorCore.
    return 80 * 1024 * 1024, 100 * 1024 * 1024, False


def _vmem_bytes(tm: int, tn: int, tk: int, has_bias: bool) -> int:
    """Rough VMEM footprint for one pipelined step (bf16 in/out, f32 acc)."""
    b = (
        2 * (tm * tk + tk * tn) * 2  # double-buffered bf16 inputs
        + 2 * tm * tn * 2            # double-buffered bf16 output
        + tm * tn * 4                # f32 accumulator scratch
    )
    if has_bias:
        b += 2 * 8 * tn * 4          # f32 bias row (sublane-padded to 8 rows)
    return b


# ---------------------------------------------------------------------------
# Tile selection
# ---------------------------------------------------------------------------

_TM_CAP = 1024
_TN_CAP = 1024
_TK_CAP = 2048


def _pick_tile(dim: int, cap: int) -> int:
    """Largest multiple-of-128 tile <= cap with modest zero-padding waste on dim."""
    d = _round_up(dim, 128)
    if d <= cap:
        return d
    t = cap
    while t > 128 and _round_up(dim, t) - dim > max(dim // 16, 128):
        t //= 2
    return t


def _pick_tm(m: int, cap: int) -> int:
    """Per-call M tile: collapse small M (decode/GEMV), big tiles for prefill."""
    if m <= cap:
        return _round_up(m, 16)
    t = cap
    while t > 128 and _round_up(m, t) - m > max(m // 16, 128):
        t //= 2
    return t


def _choose_weight_tiles(K: int, N: int):
    """Pick (tm_cap, tn, tk) once at init, VMEM-budgeted for this TPU generation."""
    budget, _, _ = _hw_params()
    tm_cap = _TM_CAP
    tn = _pick_tile(N, _TN_CAP)
    tk = _pick_tile(K, _TK_CAP)

    # Shrink (worst-case tm) until the double-buffered working set fits the budget.
    while _vmem_bytes(tm_cap, tn, tk, True) > budget and tk > 256 and tk % 256 == 0:
        tk //= 2
    while _vmem_bytes(tm_cap, tn, tk, True) > budget and tn > 256 and tn % 256 == 0:
        tn //= 2
    while _vmem_bytes(tm_cap, tn, tk, True) > budget and tm_cap > 128:
        tm_cap //= 2
    return tm_cap, tn, tk


# ---------------------------------------------------------------------------
# Kernels
# ---------------------------------------------------------------------------

def _matmul_kernel(x_ref, w_ref, o_ref, acc_ref):
    """One (tm, tn) output tile, accumulated over the innermost K grid axis."""
    k = pl.program_id(2)

    @pl.when(k == 0)
    def _init():  # direct assign: no zero-fill + add
        acc_ref[...] = jnp.dot(x_ref[...], w_ref[...],
                               preferred_element_type=jnp.float32)

    @pl.when(k > 0)
    def _accum():  # fused add-into-acc (MRB in-place accumulate on v7x)
        acc_ref[...] += jnp.dot(x_ref[...], w_ref[...],
                                preferred_element_type=jnp.float32)

    @pl.when(k == pl.num_programs(2) - 1)
    def _finalize():
        o_ref[...] = acc_ref[...].astype(o_ref.dtype)


def _matmul_bias_kernel(x_ref, w_ref, b_ref, o_ref, acc_ref):
    """Same as _matmul_kernel but fuses the f32 bias add before the bf16 cast."""
    k = pl.program_id(2)

    @pl.when(k == 0)
    def _init():
        acc_ref[...] = jnp.dot(x_ref[...], w_ref[...],
                               preferred_element_type=jnp.float32)

    @pl.when(k > 0)
    def _accum():
        acc_ref[...] += jnp.dot(x_ref[...], w_ref[...],
                                preferred_element_type=jnp.float32)

    @pl.when(k == pl.num_programs(2) - 1)
    def _finalize():
        o_ref[...] = (acc_ref[...] + b_ref[...]).astype(o_ref.dtype)


# ---------------------------------------------------------------------------
# Tiled matmul driver
# ---------------------------------------------------------------------------

@functools.partial(jax.jit, static_argnames=("tm", "tn", "tk", "n_out"))
def _tiled_matmul(x2d, wt_padded, bias_row, *, tm, tn, tk, n_out):
    """y[M, n_out] = x2d[M, K] @ wt_padded[K_pad, N_pad] (+ bias)   (bf16 out, f32 acc).

    wt_padded / bias_row are already padded to (tk, tn) multiples at init time;
    only the activation is padded here.
    """
    M, K = x2d.shape
    K_pad, N_pad = wt_padded.shape
    M_pad = _round_up(M, tm)

    if (M_pad, K_pad) != (M, K):
        # Zero-padding K contributes nothing to the sum (padded weight rows are 0 too).
        x2d = jnp.pad(x2d, ((0, M_pad - M), (0, K_pad - K)))

    grid = (N_pad // tn, M_pad // tm, K_pad // tk)  # N leading parallel axis

    has_bias = bias_row is not None
    _, limit_cap, _ = _hw_params()
    working = _vmem_bytes(tm, tn, tk, has_bias)
    vmem_limit = int(min(limit_cap, max(32 * 1024 * 1024, 2 * working)))

    in_specs = [
        pl.BlockSpec((tm, tk), lambda j, i, k: (i, k)),   # x
        pl.BlockSpec((tk, tn), lambda j, i, k: (k, j)),   # W^T (pre-transposed)
    ]
    args = (x2d, wt_padded)
    kernel = _matmul_kernel
    bytes_accessed = (M_pad * K_pad + K_pad * N_pad + M_pad * N_pad) * 2
    if has_bias:
        in_specs.append(pl.BlockSpec((1, tn), lambda j, i, k: (0, j)))  # f32 bias row
        args = (x2d, wt_padded, bias_row)
        kernel = _matmul_bias_kernel
        bytes_accessed += N_pad * 4

    out = pl.pallas_call(
        kernel,
        out_shape=jax.ShapeDtypeStruct((M_pad, N_pad), x2d.dtype),
        grid_spec=pltpu.PrefetchScalarGridSpec(
            num_scalar_prefetch=0,
            grid=grid,
            in_specs=in_specs,
            out_specs=pl.BlockSpec((tm, tn), lambda j, i, k: (i, j)),
            scratch_shapes=[pltpu.VMEM((tm, tn), jnp.float32)],
        ),
        compiler_params=pltpu.CompilerParams(
            dimension_semantics=("parallel", "parallel", "arbitrary"),
            vmem_limit_bytes=vmem_limit,
        ),
        cost_estimate=pl.CostEstimate(
            flops=2 * M_pad * K_pad * N_pad,
            transcendentals=0,
            bytes_accessed=bytes_accessed,
        ),
    )(*args)

    return out[:M, :n_out]


# ---------------------------------------------------------------------------
# Module-level wrapper
# ---------------------------------------------------------------------------

def column_parallel_linear(x, wt_padded, bias_row, n_out, *, tm_cap, tn, tk):
    """y = x @ W^T (+ bias) using an init-time padded, pre-transposed weight."""
    *lead, K = x.shape
    K_pad, N_pad = wt_padded.shape
    assert K <= K_pad, f"expected last dim <= {K_pad}, got {K}"

    x2d = x.reshape(-1, K)
    M = x2d.shape[0]

    tm = _pick_tm(M, tm_cap)

    # Megacore heuristic: only on dual-TensorCore parts (v7x) ensure >=2 blocks
    # along the leading parallel N axis when M is small, so both cores get work.
    _, _, dual_core = _hw_params()
    if dual_core and M <= 256 and (N_pad // tn) < 2 and tn >= 512 and tn % 256 == 0:
        tn = tn // 2

    y2d = _tiled_matmul(x2d, wt_padded, bias_row, tm=tm, tn=tn, tk=tk, n_out=n_out)
    return y2d.reshape(*lead, n_out)


class ColumnParallelLinearPallas:
    """Mirror of inference/model.py::ColumnParallelLinear (world_size == 1, bf16)."""

    world_size = 1
    dtype = jnp.bfloat16

    def __init__(self, in_features, out_features, bias=False, dtype=None, key=None):
        assert out_features % self.world_size == 0
        self.part_out_features = out_features // self.world_size
        self.in_features = in_features
        dtype = dtype or ColumnParallelLinearPallas.dtype
        key = key if key is not None else jax.random.PRNGKey(0)
        wkey, bkey = jax.random.split(key)

        # bf16 weights -> element_size > 1 branch of `linear`, i.e. plain F.linear.
        w = (
            jax.random.normal(wkey, (self.part_out_features, in_features), jnp.float32)
            * 0.02
        ).astype(dtype)
        self.weight = w  # PyTorch layout (out_features, in_features), for reference

        self.bias = (
            (
                jax.random.normal(bkey, (self.part_out_features,), jnp.float32) * 0.02
            ).astype(dtype)
            if bias
            else None
        )

        # ---- one-time layout work: transpose + pad the weight (and bias) ----
        # The forward path never re-transposes or re-pads the weight in HBM.
        self.tm_cap, self.tn, self.tk = _choose_weight_tiles(
            in_features, self.part_out_features
        )
        k_pad = _round_up(in_features, self.tk)
        n_pad = _round_up(self.part_out_features, self.tn)
        wt = jnp.asarray(w.T)  # (in_features, out_features)
        self.weight_t = jnp.pad(
            wt, ((0, k_pad - in_features), (0, n_pad - self.part_out_features))
        )
        if self.bias is not None:
            self.bias_row = jnp.pad(
                self.bias.astype(jnp.float32).reshape(1, -1),
                ((0, 0), (0, n_pad - self.part_out_features)),
            )
        else:
            self.bias_row = None  # bias=None uses the specialized no-bias kernel

        # TODO(synk): fp8-weight path (weight.element_size()==1 branch of `linear`:
        # act_quant + fp8_gemm + weight scales) not implemented; bf16 weights only.

    def __call__(self, x):
        return column_parallel_linear(
            x,
            self.weight_t,
            self.bias_row,
            self.part_out_features,
            tm_cap=self.tm_cap,
            tn=self.tn,
            tk=self.tk,
        )


# ---------------------------------------------------------------------------
# Self-test
# ---------------------------------------------------------------------------

if __name__ == "__main__":
    key = jax.random.PRNGKey(0)
    kx, kp1, kp2, kx2 = jax.random.split(key, 4)

    # --- Test 1: aligned shapes, with bias (exercises the fused-bias finalize) ---
    batch, seq = 2, 8
    in_features, out_features = 256, 256
    x = (jax.random.normal(kx, (batch, seq, in_features), jnp.float32) * 0.1).astype(
        jnp.bfloat16
    )
    layer = ColumnParallelLinearPallas(in_features, out_features, bias=True, key=kp1)
    y = jax.block_until_ready(layer(x))

    y_ref = (
        x.astype(jnp.float32).reshape(-1, in_features)
        @ layer.weight.astype(jnp.float32).T
        + layer.bias.astype(jnp.float32)
    ).reshape(batch, seq, out_features)
    assert y.shape == (batch, seq, out_features)
    assert y.dtype == jnp.bfloat16
    assert jnp.allclose(y.astype(jnp.float32), y_ref, atol=2e-2, rtol=2e-2)

    # --- Test 2: ragged shapes, no bias (exercises padding + no-bias kernel) ---
    in2, out2 = 200, 192
    x2 = (jax.random.normal(kx2, (3, 5, in2), jnp.float32) * 0.1).astype(jnp.bfloat16)
    layer2 = ColumnParallelLinearPallas(in2, out2, bias=False, key=kp2)
    y2 = jax.block_until_ready(layer2(x2))

    y2_ref = (
        x2.astype(jnp.float32).reshape(-1, in2) @ layer2.weight.astype(jnp.float32).T
    ).reshape(3, 5, out2)
    assert y2.shape == (3, 5, out2)
    assert y2.dtype == jnp.bfloat16
    assert jnp.allclose(y2.astype(jnp.float32), y2_ref, atol=2e-2, rtol=2e-2)

    # --- Test 3: decode/GEMV regime (tiny M) reusing layer 1 ---
    x3 = (jax.random.normal(kx, (2, 1, in_features), jnp.float32) * 0.1).astype(
        jnp.bfloat16
    )
    y3 = jax.block_until_ready(layer(x3))
    y3_ref = (
        x3.astype(jnp.float32).reshape(-1, in_features)
        @ layer.weight.astype(jnp.float32).T
        + layer.bias.astype(jnp.float32)
    ).reshape(2, 1, out_features)
    assert y3.shape == (2, 1, out_features)
    assert jnp.allclose(y3.astype(jnp.float32), y3_ref, atol=2e-2, rtol=2e-2)

    print("KERNEL_OK")
</pallas_src>

<mosaic_0001>
module attributes {stable_mosaic.version = 11 : i64} {
  func.func @_matmul_bias_kernel(%arg0: i32, %arg1: i32, %arg2: i32, %arg3: memref<16x256xbf16, #tpu.memory_space<vmem>>, %arg4: memref<256x256xbf16, #tpu.memory_space<vmem>>, %arg5: memref<1x256xf32, #tpu.memory_space<vmem>>, %arg6: memref<16x256xbf16, #tpu.memory_space<vmem>>, %arg7: memref<16x256xf32, #tpu.memory_space<vmem>>) attributes {dimension_semantics = [#tpu.dimension_semantics<parallel>, #tpu.dimension_semantics<parallel>, #tpu.dimension_semantics<arbitrary>], iteration_bounds = array<i64: 1, 1, 1>, scalar_prefetch = 0 : i64, scratch_operands = 1 : i64, tpu.core_type = #tpu.core_type<tc>, window_params = [{transform_indices = @transform_0, window_bounds = array<i64: 16, 256>}, {transform_indices = @transform_1, window_bounds = array<i64: 256, 256>}, {transform_indices = @transform_2, window_bounds = array<i64: 1, 256>}, {transform_indices = @transform_3, window_bounds = array<i64: 16, 256>}]} {
    %c0_i32 = arith.constant 0 : i32
    %0 = arith.cmpi eq, %arg2, %c0_i32 : i32
    %1 = arith.extui %0 : i1 to i32
    %c0_i32_0 = arith.constant 0 : i32
    %2 = arith.cmpi ne, %1, %c0_i32_0 : i32
    scf.if %2 {
      %c0 = arith.constant 0 : index
      %c0_5 = arith.constant 0 : index
      %9 = vector.load %arg3[%c0, %c0_5] : memref<16x256xbf16, #tpu.memory_space<vmem>>, vector<16x256xbf16>
      %c0_6 = arith.constant 0 : index
      %c0_7 = arith.constant 0 : index
      %10 = vector.load %arg4[%c0_6, %c0_7] : memref<256x256xbf16, #tpu.memory_space<vmem>>, vector<256x256xbf16>
      %cst = arith.constant dense<0.000000e+00> : vector<16x256xf32>
      %11 = tpu.matmul %9, %10, %cst {dimension_numbers = #tpu.dot_dimension_numbers<[1], [0], [0], [1], [0, 0, 1, 1], [], []>} : vector<16x256xbf16>, vector<256x256xbf16>, vector<16x256xf32> -> vector<16x256xf32>
      %c0_8 = arith.constant 0 : index
      %c0_9 = arith.constant 0 : index
      %12 = vector.load %arg7[%c0_8, %c0_9] : memref<16x256xf32, #tpu.memory_space<vmem>>, vector<16x256xf32>
      tpu.vector_store %arg7[%c0_8, %c0_9], %11 {strides = array<i32>} : memref<16x256xf32, #tpu.memory_space<vmem>>, vector<16x256xf32>,
    } else {
    }
    %c0_i32_1 = arith.constant 0 : i32
    %3 = arith.cmpi sgt, %arg2, %c0_i32_1 : i32
    %4 = arith.extui %3 : i1 to i32
    %c0_i32_2 = arith.constant 0 : i32
    %5 = arith.cmpi ne, %4, %c0_i32_2 : i32
    scf.if %5 {
      %c0 = arith.constant 0 : index
      %c0_5 = arith.constant 0 : index
      %9 = vector.load %arg7[%c0, %c0_5] : memref<16x256xf32, #tpu.memory_space<vmem>>, vector<16x256xf32>
      %c0_6 = arith.constant 0 : index
      %c0_7 = arith.constant 0 : index
      %10 = vector.load %arg3[%c0_6, %c0_7] : memref<16x256xbf16, #tpu.memory_space<vmem>>, vector<16x256xbf16>
      %c0_8 = arith.constant 0 : index
      %c0_9 = arith.constant 0 : index
      %11 = vector.load %arg4[%c0_8, %c0_9] : memref<256x256xbf16, #tpu.memory_space<vmem>>, vector<256x256xbf16>
      %cst = arith.constant dense<0.000000e+00> : vector<16x256xf32>
      %12 = tpu.matmul %10, %11, %cst {dimension_numbers = #tpu.dot_dimension_numbers<[1], [0], [0], [1], [0, 0, 1, 1], [], []>} : vector<16x256xbf16>, vector<256x256xbf16>, vector<16x256xf32> -> vector<16x256xf32>
      %13 = arith.addf %9, %12 : vector<16x256xf32>
      %c0_10 = arith.constant 0 : index
      %c0_11 = arith.constant 0 : index
      %14 = vector.load %arg7[%c0_10, %c0_11] : memref<16x256xf32, #tpu.memory_space<vmem>>, vector<16x256xf32>
      tpu.vector_store %arg7[%c0_10, %c0_11], %13 {strides = array<i32>} : memref<16x256xf32, #tpu.memory_space<vmem>>, vector<16x256xf32>,
    } else {
    }
    %c0_i32_3 = arith.constant 0 : i32
    %6 = arith.cmpi eq, %arg2, %c0_i32_3 : i32
    %7 = arith.extui %6 : i1 to i32
    %c0_i32_4 = arith.constant 0 : i32
    %8 = arith.cmpi ne, %7, %c0_i32_4 : i32
    scf.if %8 {
      %c0 = arith.constant 0 : index
      %c0_5 = arith.constant 0 : index
      %9 = vector.load %arg7[%c0, %c0_5] : memref<16x256xf32, #tpu.memory_space<vmem>>, vector<16x256xf32>
      %c0_6 = arith.constant 0 : index
      %c0_7 = arith.constant 0 : index
      %10 = vector.load %arg5[%c0_6, %c0_7] : memref<1x256xf32, #tpu.memory_space<vmem>>, vector<1x256xf32>
      %11 = vector.broadcast %10 : vector<1x256xf32> to vector<16x256xf32>
      %12 = arith.addf %9, %11 : vector<16x256xf32>
      %13 = arith.truncf %12 : vector<16x256xf32> to vector<16x256xbf16>
      %c0_8 = arith.constant 0 : index
      %c0_9 = arith.constant 0 : index
      %14 = vector.load %arg6[%c0_8, %c0_9] : memref<16x256xbf16, #tpu.memory_space<vmem>>, vector<16x256xbf16>
      tpu.vector_store %arg6[%c0_8, %c0_9], %13 {strides = array<i32>} : memref<16x256xbf16, #tpu.memory_space<vmem>>, vector<16x256xbf16>,
    } else {
    }
    return
  }
  func.func @transform_0(%arg0: i32, %arg1: i32, %arg2: i32) -> (i32, i32) {
    %c0_i32 = arith.constant 0 : i32
    return %arg1, %arg2 : i32, i32
  }
  func.func @transform_1(%arg0: i32, %arg1: i32, %arg2: i32) -> (i32, i32) {
    %c0_i32 = arith.constant 0 : i32
    return %arg2, %arg0 : i32, i32
  }
  func.func @transform_2(%arg0: i32, %arg1: i32, %arg2: i32) -> (i32, i32) {
    %c0_i32 = arith.constant 0 : i32
    %c0_i32_0 = arith.constant 0 : i32
    return %c0_i32, %arg0 : i32, i32
  }
  func.func @transform_3(%arg0: i32, %arg1: i32, %arg2: i32) -> (i32, i32) {
    %c0_i32 = arith.constant 0 : i32
    return %arg1, %arg0 : i32, i32
  }
}

</mosaic_0001>

<llo_original>
// kernel: _tiled_matmul.1
$region0: #{_tiled_matmul.1}
  #allocation0 [shape = 'u32[]', space=smem, size = 0x4, offset = 0x4, fixed_abs, tag = 'smem constant byte address 0x4 - core index']
  #allocation1 [shape = 'u32[144,128]{1,0:T(1,128)}', space=vmem, size = 0x12000, scoped, tag = 'internal scratch']
  #allocation2 [shape = 'f32[16,256]{1,0:T(8,128)}', space=vmem, size = 0x4000, scoped, tag = 'scratch operand']
  %s0 = inlined_call_operand.hbm [shape: bf16[16,256], index: 0, kind: input, shape index: {}]
  %s1 = inlined_call_operand.hbm [shape: bf16[256,256], index: 1, kind: input, shape index: {}]
  %s2 = inlined_call_operand.vmem [shape: f32[1,256], index: 2, kind: input, shape index: {}]
  %s3 = inlined_call_operand.hbm [shape: bf16[16,256], index: 3, kind: output, shape index: {}]
  %s4 = sld [smem:[#allocation0]]
  $region42: #{_tiled_matmul.1} parent=0
    _
  %s6 = ssub.s32 1, %s4
  %s7 = scalar_select 0, %s6, %s4
  $region1: #{_tiled_matmul.1} parent=0
    #allocation3 [shape = 'u8[8192]{0}', space=vmem, size = 0x2000, scoped, tag = 'input window, operand 0, single buffered']
    #allocation4 [shape = 's32[1]{0}', space=sflag, size = 0x4, scoped, tag = 'scoped memory for _tiled_matmul.1']
    #allocation5 [shape = 's32[1]{0}', space=sflag, size = 0x4, scoped, tag = 'scoped memory for _tiled_matmul.1']
    #allocation6 [shape = 'u8[131072]{0}', space=vmem, size = 0x20000, scoped, tag = 'input window, operand 1, single buffered']
    #allocation7 [shape = 's32[1]{0}', space=sflag, size = 0x4, scoped, tag = 'scoped memory for _tiled_matmul.1']
    #allocation8 [shape = 'u8[8192]{0}', space=vmem, size = 0x2000, scoped, tag = 'output window, operand 0, single buffered']
    %8 = vsyncpa [#allocation4], 0
    %9 = vsyncpa [#allocation7], 0
    %10 = vsyncpa [#allocation5], 0
    // Predicated region
    $region2: #{_tiled_matmul.1} parent=1 // pred_check
      _
    $region3: #{_tiled_matmul.1} parent=1 // pred_check_branch
      %12 = sbr.rel (0) target = $region5
    $region4: #{_tiled_matmul.1} parent=1 // pred_region
      %s14 = ssub.s32 256, 256
      %15 = vsyncadd [#allocation4], %s14
      %s16 = sshll.u32 [#allocation3], 4
      %s17 = int_to_ptr.vmem [resolvable:$true] %s16
      %22 = dma.hbm_to_vmem [thread:$0]  %s0, 256, %s17, [#allocation4], 128, 128, 8
    $region5: #{_tiled_matmul.1} parent=1 // pred_fallthru
      _
    // Predicated region
    $region6: #{_tiled_matmul.1} parent=1 // pred_check
      _
    $region7: #{_tiled_matmul.1} parent=1 // pred_check_branch
      %24 = sbr.rel (0) target = $region9
    $region8: #{_tiled_matmul.1} parent=1 // pred_region
      %s26 = ssub.s32 4096, 4096
      %27 = vsyncadd [#allocation7], %s26
      %s28 = sshll.u32 [#allocation6], 4
      %s29 = int_to_ptr.vmem [resolvable:$true] %s28
      %34 = dma.hbm_to_vmem [thread:$0]  %s1, 4096, %s29, [#allocation7], 128, 128, 8
    $region9: #{_tiled_matmul.1} parent=1 // pred_fallthru
      _
    // Predicated region
    $region10: #{_tiled_matmul.1} parent=1 // pred_check
      _
    $region11: #{_tiled_matmul.1} parent=1 // pred_check_branch
      %36 = sbr.rel (0) target = $region13
    $region12: #{_tiled_matmul.1} parent=1 // pred_region
      _
    $region13: #{_tiled_matmul.1} parent=1 // pred_fallthru
      _
    // Predicated region
    $region14: #{_tiled_matmul.1} parent=1 // pred_check
      _
    $region15: #{_tiled_matmul.1} parent=1 // pred_check_branch
      %38 = sbr.rel (0) target = $region17
    $region16: #{_tiled_matmul.1} parent=1 // pred_region
      %39 = dma.done [#allocation4], 256
    $region17: #{_tiled_matmul.1} parent=1 // pred_fallthru
      _
    // Predicated region
    $region18: #{_tiled_matmul.1} parent=1 // pred_check
      _
    $region19: #{_tiled_matmul.1} parent=1 // pred_check_branch
      %41 = sbr.rel (0) target = $region21
    $region20: #{_tiled_matmul.1} parent=1 // pred_region
      %42 = dma.done [#allocation7], 4096
    $region21: #{_tiled_matmul.1} parent=1 // pred_fallthru
      _
    %p43 = scmp.eq.s32.totalorder 0, 0
    // Predicated region
    $region22: #{_tiled_matmul.1} parent=1 // pred_check
      %p44 = pneg %p43
    $region23: #{_tiled_matmul.1} parent=1 // pred_check_branch
      %46 = sbr.rel (%p44) target = $region25
    $region24: #{_tiled_matmul.1} parent=1 // pred_region
      %v47 = vld [vmem:[#allocation3] sm:$0xff]
      %v48 = vld [vmem:[#allocation3 + $0x8] sm:$0xff]
      %v49 = vld [vmem:[#allocation6] sm:$0xff]
      %v50 = vld [vmem:[#allocation6 + $0x8] sm:$0xff]
      %v51 = vld [vmem:[#allocation6 + $0x10] sm:$0xff]
      %v52 = vld [vmem:[#allocation6 + $0x18] sm:$0xff]
      %v53 = vld [vmem:[#allocation6 + $0x20] sm:$0xff]
      %v54 = vld [vmem:[#allocation6 + $0x28] sm:$0xff]
      %v55 = vld [vmem:[#allocation6 + $0x30] sm:$0xff]
      %v56 = vld [vmem:[#allocation6 + $0x38] sm:$0xff]
      %v57 = vld [vmem:[#allocation6 + $0x40] sm:$0xff]
      %v58 = vld [vmem:[#allocation6 + $0x48] sm:$0xff]
      %v59 = vld [vmem:[#allocation6 + $0x50] sm:$0xff]
      %v60 = vld [vmem:[#allocation6 + $0x58] sm:$0xff]
      %v61 = vld [vmem:[#allocation6 + $0x60] sm:$0xff]
      %v62 = vld [vmem:[#allocation6 + $0x68] sm:$0xff]
      %v63 = vld [vmem:[#allocation6 + $0x70] sm:$0xff]
      %v64 = vld [vmem:[#allocation6 + $0x78] sm:$0xff]
      %v65 = vld [vmem:[#allocation6 + $0x80] sm:$0xff]
      %v66 = vld [vmem:[#allocation6 + $0x88] sm:$0xff]
      %v67 = vld [vmem:[#allocation6 + $0x90] sm:$0xff]
      %v68 = vld [vmem:[#allocation6 + $0x98] sm:$0xff]
      %v69 = vld [vmem:[#allocation6 + $0xa0] sm:$0xff]
      %v70 = vld [vmem:[#allocation6 + $0xa8] sm:$0xff]
      %v71 = vld [vmem:[#allocation6 + $0xb0] sm:$0xff]
      %v72 = vld [vmem:[#allocation6 + $0xb8] sm:$0xff]
      %v73 = vld [vmem:[#allocation6 + $0xc0] sm:$0xff]
      %v74 = vld [vmem:[#allocation6 + $0xc8] sm:$0xff]
      %v75 = vld [vmem:[#allocation6 + $0xd0] sm:$0xff]
      %v76 = vld [vmem:[#allocation6 + $0xd8] sm:$0xff]
      %v77 = vld [vmem:[#allocation6 + $0xe0] sm:$0xff]
      %v78 = vld [vmem:[#allocation6 + $0xe8] sm:$0xff]
      %v79 = vld [vmem:[#allocation6 + $0xf0] sm:$0xff]
      %v80 = vld [vmem:[#allocation6 + $0xf8] sm:$0xff]
      %v83 = vunpack.c.l.b16 %v47
      %v84 = vunpack.c.h.b16 %v47
      %v85 = vunpack.c.l.b16 %v48
      %v86 = vunpack.c.h.b16 %v48
      %v87 = vpack.c.b16 %v85, %v83
      %v88 = vpack.c.b16 %v86, %v84
      %v123 = vunpack.c.l.b16 %v49
      %v124 = vunpack.c.h.b16 %v49
      %v125 = vunpack.c.l.b16 %v50
      %v126 = vunpack.c.h.b16 %v50
      %v127 = vunpack.c.l.b16 %v51
      %v128 = vunpack.c.h.b16 %v51
      %v129 = vunpack.c.l.b16 %v52
      %v130 = vunpack.c.h.b16 %v52
      %v131 = vunpack.c.l.b16 %v53
      %v132 = vunpack.c.h.b16 %v53
      %v133 = vunpack.c.l.b16 %v54
      %v134 = vunpack.c.h.b16 %v54
      %v135 = vunpack.c.l.b16 %v55
      %v136 = vunpack.c.h.b16 %v55
      %v137 = vunpack.c.l.b16 %v56
      %v138 = vunpack.c.h.b16 %v56
      %v139 = vunpack.c.l.b16 %v57
      %v140 = vunpack.c.h.b16 %v57
      %v141 = vunpack.c.l.b16 %v58
      %v142 = vunpack.c.h.b16 %v58
      %v143 = vunpack.c.l.b16 %v59
      %v144 = vunpack.c.h.b16 %v59
      %v145 = vunpack.c.l.b16 %v60
      %v146 = vunpack.c.h.b16 %v60
      %v147 = vunpack.c.l.b16 %v61
      %v148 = vunpack.c.h.b16 %v61
      %v149 = vunpack.c.l.b16 %v62
      %v150 = vunpack.c.h.b16 %v62
      %v151 = vunpack.c.l.b16 %v63
      %v152 = vunpack.c.h.b16 %v63
      %v153 = vunpack.c.l.b16 %v64
      %v154 = vunpack.c.h.b16 %v64
      %v155 = vunpack.c.l.b16 %v65
      %v156 = vunpack.c.h.b16 %v65
      %v157 = vunpack.c.l.b16 %v66
      %v158 = vunpack.c.h.b16 %v66
      %v159 = vunpack.c.l.b16 %v67
      %v160 = vunpack.c.h.b16 %v67
      %v161 = vunpack.c.l.b16 %v68
      %v162 = vunpack.c.h.b16 %v68
      %v163 = vunpack.c.l.b16 %v69
      %v164 = vunpack.c.h.b16 %v69
      %v165 = vunpack.c.l.b16 %v70
      %v166 = vunpack.c.h.b16 %v70
      %v167 = vunpack.c.l.b16 %v71
      %v168 = vunpack.c.h.b16 %v71
      %v169 = vunpack.c.l.b16 %v72
      %v170 = vunpack.c.h.b16 %v72
      %v171 = vunpack.c.l.b16 %v73
      %v172 = vunpack.c.h.b16 %v73
      %v173 = vunpack.c.l.b16 %v74
      %v174 = vunpack.c.h.b16 %v74
      %v175 = vunpack.c.l.b16 %v75
      %v176 = vunpack.c.h.b16 %v75
      %v177 = vunpack.c.l.b16 %v76
      %v178 = vunpack.c.h.b16 %v76
      %v179 = vunpack.c.l.b16 %v77
      %v180 = vunpack.c.h.b16 %v77
      %v181 = vunpack.c.l.b16 %v78
      %v182 = vunpack.c.h.b16 %v78
      %v183 = vunpack.c.l.b16 %v79
      %v184 = vunpack.c.h.b16 %v79
      %v185 = vunpack.c.l.b16 %v80
      %v186 = vunpack.c.h.b16 %v80
      %v187 = vpack.c.b16 %v125, %v123
      %v188 = vpack.c.b16 %v126, %v124
      %v189 = vpack.c.b16 %v129, %v127
      %v190 = vpack.c.b16 %v130, %v128
      %v191 = vpack.c.b16 %v133, %v131
      %v192 = vpack.c.b16 %v134, %v132
      %v193 = vpack.c.b16 %v137, %v135
      %v194 = vpack.c.b16 %v138, %v136
      %v195 = vpack.c.b16 %v141, %v139
      %v196 = vpack.c.b16 %v142, %v140
      %v197 = vpack.c.b16 %v145, %v143
      %v198 = vpack.c.b16 %v146, %v144
      %v199 = vpack.c.b16 %v149, %v147
      %v200 = vpack.c.b16 %v150, %v148
      %v201 = vpack.c.b16 %v153, %v151
      %v202 = vpack.c.b16 %v154, %v152
      %v203 = vpack.c.b16 %v157, %v155
      %v204 = vpack.c.b16 %v158, %v156
      %v205 = vpack.c.b16 %v161, %v159
      %v206 = vpack.c.b16 %v162, %v160
      %v207 = vpack.c.b16 %v165, %v163
      %v208 = vpack.c.b16 %v166, %v164
      %v209 = vpack.c.b16 %v169, %v167
      %v210 = vpack.c.b16 %v170, %v168
      %v211 = vpack.c.b16 %v173, %v171
      %v212 = vpack.c.b16 %v174, %v172
      %v213 = vpack.c.b16 %v177, %v175
      %v214 = vpack.c.b16 %v178, %v176
      %v215 = vpack.c.b16 %v181, %v179
      %v216 = vpack.c.b16 %v182, %v180
      %v217 = vpack.c.b16 %v185, %v183
      %v218 = vpack.c.b16 %v186, %v184
      %251 = vmatprep.subr.bf16.mxu0 %v188
      %252 = vmatpush1.bf16.msra.mxu0 %v187
      %253 = vmatprep.subr.bf16.mxu0 %v190
      %254 = vmatpush1.bf16.msra.mxu0 %v189
      %255 = vmatprep.subr.bf16.mxu0 %v192
      %256 = vmatpush1.bf16.msra.mxu0 %v191
      %257 = vmatprep.subr.bf16.mxu0 %v194
      %258 = vmatpush1.bf16.msra.mxu0 %v193
      %259 = vmatprep.subr.bf16.mxu0 %v196
      %260 = vmatpush1.bf16.msra.mxu0 %v195
      %261 = vmatprep.subr.bf16.mxu0 %v198
      %262 = vmatpush1.bf16.msra.mxu0 %v197
      %263 = vmatprep.subr.bf16.mxu0 %v200
      %264 = vmatpush1.bf16.msra.mxu0 %v199
      %265 = vmatprep.subr.bf16.mxu0 %v202
      %266 = vmatpush1.bf16.msra.mxu0 %v201
      %267 = vmatprep.subr.bf16.mxu0 %v204
      %268 = vmatpush1.bf16.msra.mxu0 %v203
      %269 = vmatprep.subr.bf16.mxu0 %v206
      %270 = vmatpush1.bf16.msra.mxu0 %v205
      %271 = vmatprep.subr.bf16.mxu0 %v208
      %272 = vmatpush1.bf16.msra.mxu0 %v207
      %273 = vmatprep.subr.bf16.mxu0 %v210
      %274 = vmatpush1.bf16.msra.mxu0 %v209
      %275 = vmatprep.subr.bf16.mxu0 %v212
      %276 = vmatpush1.bf16.msra.mxu0 %v211
      %277 = vmatprep.subr.bf16.mxu0 %v214
      %278 = vmatpush1.bf16.msra.mxu0 %v213
      %279 = vmatprep.subr.bf16.mxu0 %v216
      %280 = vmatpush1.bf16.msra.mxu0 %v215
      %281 = vmatprep.subr.bf16.mxu0 %v218
      %282 = vmatpush1.bf16.msra.mxu0 %v217
      %283 = vmatprep.mubr.bf16.mxu0 %v88
      %284 = vmatmul.mubr.bf16.gmra.mrb[0].mxu0 %v87
      %v285 = vpop.f32.mrb[0].mxu0
      %v286 = vadd.f32 0.0, %v285
      %v287 = vpop.f32.mrb[0].mxu0
      %v288 = vadd.f32 0.0, %v287
      %v289 = vpop.f32.mrb[0].mxu0
      %v290 = vadd.f32 0.0, %v289
      %v291 = vpop.f32.mrb[0].mxu0
      %v292 = vadd.f32 0.0, %v291
      %293 = vdwg.mxu0
      %294 = vst [vmem:[#allocation2] sm:$0xff] %v286
      %295 = vst [vmem:[#allocation2 + $0x8] sm:$0xff] %v288
      %296 = vst [vmem:[#allocation2 + $0x10] sm:$0xff] %v290
      %297 = vst [vmem:[#allocation2 + $0x18] sm:$0xff] %v292
    $region25: #{_tiled_matmul.1} parent=1 // pred_fallthru
      _
    %p298 = scmp.gt.s32.totalorder 0, 0
    // Predicated region
    $region26: #{_tiled_matmul.1} parent=1 // pred_check
      %p299 = pneg %p298
    $region27: #{_tiled_matmul.1} parent=1 // pred_check_branch
      %301 = sbr.rel (%p299) target = $region29
    $region28: #{_tiled_matmul.1} parent=1 // pred_region
      %v302 = vld [vmem:[#allocation2] sm:$0xff]
      %v303 = vld [vmem:[#allocation2 + $0x8] sm:$0xff]
      %v304 = vld [vmem:[#allocation2 + $0x10] sm:$0xff]
      %v305 = vld [vmem:[#allocation2 + $0x18] sm:$0xff]
      %v306 = vld [vmem:[#allocation3] sm:$0xff]
      %v307 = vld [vmem:[#allocation3 + $0x8] sm:$0xff]
      %v308 = vld [vmem:[#allocation6] sm:$0xff]
      %v309 = vld [vmem:[#allocation6 + $0x8] sm:$0xff]
      %v310 = vld [vmem:[#allocation6 + $0x10] sm:$0xff]
      %v311 = vld [vmem:[#allocation6 + $0x18] sm:$0xff]
      %v312 = vld [vmem:[#allocation6 + $0x20] sm:$0xff]
      %v313 = vld [vmem:[#allocation6 + $0x28] sm:$0xff]
      %v314 = vld [vmem:[#allocation6 + $0x30] sm:$0xff]
      %v315 = vld [vmem:[#allocation6 + $0x38] sm:$0xff]
      %v316 = vld [vmem:[#allocation6 + $0x40] sm:$0xff]
      %v317 = vld [vmem:[#allocation6 + $0x48] sm:$0xff]
      %v318 = vld [vmem:[#allocation6 + $0x50] sm:$0xff]
      %v319 = vld [vmem:[#allocation6 + $0x58] sm:$0xff]
      %v320 = vld [vmem:[#allocation6 + $0x60] sm:$0xff]
      %v321 = vld [vmem:[#allocation6 + $0x68] sm:$0xff]
      %v322 = vld [vmem:[#allocation6 + $0x70] sm:$0xff]
      %v323 = vld [vmem:[#allocation6 + $0x78] sm:$0xff]
      %v324 = vld [vmem:[#allocation6 + $0x80] sm:$0xff]
      %v325 = vld [vmem:[#allocation6 + $0x88] sm:$0xff]
      %v326 = vld [vmem:[#allocation6 + $0x90] sm:$0xff]
      %v327 = vld [vmem:[#allocation6 + $0x98] sm:$0xff]
      %v328 = vld [vmem:[#allocation6 + $0xa0] sm:$0xff]
      %v329 = vld [vmem:[#allocation6 + $0xa8] sm:$0xff]
      %v330 = vld [vmem:[#allocation6 + $0xb0] sm:$0xff]
      %v331 = vld [vmem:[#allocation6 + $0xb8] sm:$0xff]
      %v332 = vld [vmem:[#allocation6 + $0xc0] sm:$0xff]
      %v333 = vld [vmem:[#allocation6 + $0xc8] sm:$0xff]
      %v334 = vld [vmem:[#allocation6 + $0xd0] sm:$0xff]
      %v335 = vld [vmem:[#allocation6 + $0xd8] sm:$0xff]
      %v336 = vld [vmem:[#allocation6 + $0xe0] sm:$0xff]
      %v337 = vld [vmem:[#allocation6 + $0xe8] sm:$0xff]
      %v338 = vld [vmem:[#allocation6 + $0xf0] sm:$0xff]
      %v339 = vld [vmem:[#allocation6 + $0xf8] sm:$0xff]
      %v342 = vunpack.c.l.b16 %v306
      %v343 = vunpack.c.h.b16 %v306
      %v344 = vunpack.c.l.b16 %v307
      %v345 = vunpack.c.h.b16 %v307
      %v346 = vpack.c.b16 %v344, %v342
      %v347 = vpack.c.b16 %v345, %v343
      %v382 = vunpack.c.l.b16 %v308
      %v383 = vunpack.c.h.b16 %v308
      %v384 = vunpack.c.l.b16 %v309
      %v385 = vunpack.c.h.b16 %v309
      %v386 = vunpack.c.l.b16 %v310
      %v387 = vunpack.c.h.b16 %v310
      %v388 = vunpack.c.l.b16 %v311
      %v389 = vunpack.c.h.b16 %v311
      %v390 = vunpack.c.l.b16 %v312
      %v391 = vunpack.c.h.b16 %v312
      %v392 = vunpack.c.l.b16 %v313
      %v393 = vunpack.c.h.b16 %v313
      %v394 = vunpack.c.l.b16 %v314
      %v395 = vunpack.c.h.b16 %v314
      %v396 = vunpack.c.l.b16 %v315
      %v397 = vunpack.c.h.b16 %v315
      %v398 = vunpack.c.l.b16 %v316
      %v399 = vunpack.c.h.b16 %v316
      %v400 = vunpack.c.l.b16 %v317
      %v401 = vunpack.c.h.b16 %v317
      %v402 = vunpack.c.l.b16 %v318
      %v403 = vunpack.c.h.b16 %v318
      %v404 = vunpack.c.l.b16 %v319
      %v405 = vunpack.c.h.b16 %v319
      %v406 = vunpack.c.l.b16 %v320
      %v407 = vunpack.c.h.b16 %v320
      %v408 = vunpack.c.l.b16 %v321
      %v409 = vunpack.c.h.b16 %v321
      %v410 = vunpack.c.l.b16 %v322
      %v411 = vunpack.c.h.b16 %v322
      %v412 = vunpack.c.l.b16 %v323
      %v413 = vunpack.c.h.b16 %v323
      %v414 = vunpack.c.l.b16 %v324
      %v415 = vunpack.c.h.b16 %v324
      %v416 = vunpack.c.l.b16 %v325
      %v417 = vunpack.c.h.b16 %v325
      %v418 = vunpack.c.l.b16 %v326
      %v419 = vunpack.c.h.b16 %v326
      %v420 = vunpack.c.l.b16 %v327
      %v421 = vunpack.c.h.b16 %v327
      %v422 = vunpack.c.l.b16 %v328
      %v423 = vunpack.c.h.b16 %v328
      %v424 = vunpack.c.l.b16 %v329
      %v425 = vunpack.c.h.b16 %v329
      %v426 = vunpack.c.l.b16 %v330
      %v427 = vunpack.c.h.b16 %v330
      %v428 = vunpack.c.l.b16 %v331
      %v429 = vunpack.c.h.b16 %v331
      %v430 = vunpack.c.l.b16 %v332
      %v431 = vunpack.c.h.b16 %v332
      %v432 = vunpack.c.l.b16 %v333
      %v433 = vunpack.c.h.b16 %v333
      %v434 = vunpack.c.l.b16 %v334
      %v435 = vunpack.c.h.b16 %v334
      %v436 = vunpack.c.l.b16 %v335
      %v437 = vunpack.c.h.b16 %v335
      %v438 = vunpack.c.l.b16 %v336
      %v439 = vunpack.c.h.b16 %v336
      %v440 = vunpack.c.l.b16 %v337
      %v441 = vunpack.c.h.b16 %v337
      %v442 = vunpack.c.l.b16 %v338
      %v443 = vunpack.c.h.b16 %v338
      %v444 = vunpack.c.l.b16 %v339
      %v445 = vunpack.c.h.b16 %v339
      %v446 = vpack.c.b16 %v384, %v382
      %v447 = vpack.c.b16 %v385, %v383
      %v448 = vpack.c.b16 %v388, %v386
      %v449 = vpack.c.b16 %v389, %v387
      %v450 = vpack.c.b16 %v392, %v390
      %v451 = vpack.c.b16 %v393, %v391
      %v452 = vpack.c.b16 %v396, %v394
      %v453 = vpack.c.b16 %v397, %v395
      %v454 = vpack.c.b16 %v400, %v398
      %v455 = vpack.c.b16 %v401, %v399
      %v456 = vpack.c.b16 %v404, %v402
      %v457 = vpack.c.b16 %v405, %v403
      %v458 = vpack.c.b16 %v408, %v406
      %v459 = vpack.c.b16 %v409, %v407
      %v460 = vpack.c.b16 %v412, %v410
      %v461 = vpack.c.b16 %v413, %v411
      %v462 = vpack.c.b16 %v416, %v414
      %v463 = vpack.c.b16 %v417, %v415
      %v464 = vpack.c.b16 %v420, %v418
      %v465 = vpack.c.b16 %v421, %v419
      %v466 = vpack.c.b16 %v424, %v422
      %v467 = vpack.c.b16 %v425, %v423
      %v468 = vpack.c.b16 %v428, %v426
      %v469 = vpack.c.b16 %v429, %v427
      %v470 = vpack.c.b16 %v432, %v430
      %v471 = vpack.c.b16 %v433, %v431
      %v472 = vpack.c.b16 %v436, %v434
      %v473 = vpack.c.b16 %v437, %v435
      %v474 = vpack.c.b16 %v440, %v438
      %v475 = vpack.c.b16 %v441, %v439
      %v476 = vpack.c.b16 %v444, %v442
      %v477 = vpack.c.b16 %v445, %v443
      %510 = vmatprep.subr.bf16.mxu0 %v447
      %511 = vmatpush1.bf16.msra.mxu0 %v446
      %512 = vmatprep.subr.bf16.mxu0 %v449
      %513 = vmatpush1.bf16.msra.mxu0 %v448
      %514 = vmatprep.subr.bf16.mxu0 %v451
      %515 = vmatpush1.bf16.msra.mxu0 %v450
      %516 = vmatprep.subr.bf16.mxu0 %v453
      %517 = vmatpush1.bf16.msra.mxu0 %v452
      %518 = vmatprep.subr.bf16.mxu0 %v455
      %519 = vmatpush1.bf16.msra.mxu0 %v454
      %520 = vmatprep.subr.bf16.mxu0 %v457
      %521 = vmatpush1.bf16.msra.mxu0 %v456
      %522 = vmatprep.subr.bf16.mxu0 %v459
      %523 = vmatpush1.bf16.msra.mxu0 %v458
      %524 = vmatprep.subr.bf16.mxu0 %v461
      %525 = vmatpush1.bf16.msra.mxu0 %v460
      %526 = vmatprep.subr.bf16.mxu0 %v463
      %527 = vmatpush1.bf16.msra.mxu0 %v462
      %528 = vmatprep.subr.bf16.mxu0 %v465
      %529 = vmatpush1.bf16.msra.mxu0 %v464
      %530 = vmatprep.subr.bf16.mxu0 %v467
      %531 = vmatpush1.bf16.msra.mxu0 %v466
      %532 = vmatprep.subr.bf16.mxu0 %v469
      %533 = vmatpush1.bf16.msra.mxu0 %v468
      %534 = vmatprep.subr.bf16.mxu0 %v471
      %535 = vmatpush1.bf16.msra.mxu0 %v470
      %536 = vmatprep.subr.bf16.mxu0 %v473
      %537 = vmatpush1.bf16.msra.mxu0 %v472
      %538 = vmatprep.subr.bf16.mxu0 %v475
      %539 = vmatpush1.bf16.msra.mxu0 %v474
      %540 = vmatprep.subr.bf16.mxu0 %v477
      %541 = vmatpush1.bf16.msra.mxu0 %v476
      %542 = vmatprep.mubr.bf16.mxu0 %v347
      %543 = vmatmul.mubr.bf16.gmra.mrb[0].mxu0 %v346
      %v544 = vpop.f32.mrb[0].mxu0
      %v545 = vadd.f32 0.0, %v544
      %v546 = vpop.f32.mrb[0].mxu0
      %v547 = vadd.f32 0.0, %v546
      %v548 = vpop.f32.mrb[0].mxu0
      %v549 = vadd.f32 0.0, %v548
      %v550 = vpop.f32.mrb[0].mxu0
      %v551 = vadd.f32 0.0, %v550
      %552 = vdwg.mxu0
      %v553 = vadd.f32 %v302, %v545
      %v554 = vadd.f32 %v303, %v547
      %v555 = vadd.f32 %v304, %v549
      %v556 = vadd.f32 %v305, %v551
      %557 = vst [vmem:[#allocation2] sm:$0xff] %v553
      %558 = vst [vmem:[#allocation2 + $0x8] sm:$0xff] %v554
      %559 = vst [vmem:[#allocation2 + $0x10] sm:$0xff] %v555
      %560 = vst [vmem:[#allocation2 + $0x18] sm:$0xff] %v556
    $region29: #{_tiled_matmul.1} parent=1 // pred_fallthru
      _
    // Predicated region
    $region30: #{_tiled_matmul.1} parent=1 // pred_check
      %p561 = pneg %p43
    $region31: #{_tiled_matmul.1} parent=1 // pred_check_branch
      %563 = sbr.rel (%p561) target = $region33
    $region32: #{_tiled_matmul.1} parent=1 // pred_region
      %v564 = vld [vmem:[#allocation2] sm:$0xff]
      %v565 = vld [vmem:[#allocation2 + $0x8] sm:$0xff]
      %v566 = vld [vmem:[#allocation2 + $0x10] sm:$0xff]
      %v567 = vld [vmem:[#allocation2 + $0x18] sm:$0xff]
      %v568 = vld [vmem:[%s2] sm:$0x3]
      %v570 = vlaneseq
      %v571 = vshrl.u32 %v570, 7
      %v572 = vsub.s32 0, %v571
      %v573 = vrot.slane %v568, %v572
      %v574 = vlaneseq
      %v575 = vshrl.u32 %v574, 7
      %v576 = vsub.s32 1, %v575
      %v577 = vrot.slane %v568, %v576
      %v580 = vadd.f32 %v564, %v573
      %v581 = vadd.f32 %v565, %v577
      %v582 = vadd.f32 %v566, %v573
      %v583 = vadd.f32 %v567, %v577
      %v584 = vpack.c.bf16 %v582, %v580
      %v585 = vpack.c.bf16 %v583, %v581
      %v588 = vunpack.c.l.b16 %v584
      %v589 = vunpack.c.l.b16 %v585
      %v590 = vunpack.c.h.b16 %v584
      %v591 = vunpack.c.h.b16 %v585
      %v592 = vpack.c.b16 %v589, %v588
      %v593 = vpack.c.b16 %v591, %v590
      %596 = vst [vmem:[#allocation8] sm:$0xff] %v592
      %597 = vst [vmem:[#allocation8 + $0x8] sm:$0xff] %v593
    $region33: #{_tiled_matmul.1} parent=1 // pred_fallthru
      _
    // Predicated region
    $region34: #{_tiled_matmul.1} parent=1 // pred_check
      _
    $region35: #{_tiled_matmul.1} parent=1 // pred_check_branch
      %599 = sbr.rel (0) target = $region37
    $region36: #{_tiled_matmul.1} parent=1 // pred_region
      %s601 = ssub.s32 256, 256
      %602 = vsyncadd [#allocation5], %s601
      %s603 = sshll.u32 [#allocation8], 4
      %s604 = int_to_ptr.vmem [resolvable:$true] %s603
      %609 = dma.vmem_to_hbm [thread:$0]  %s604, 256, %s3, [#allocation5], 128, 128, 8
    $region37: #{_tiled_matmul.1} parent=1 // pred_fallthru
      _
    // Predicated region
    $region38: #{_tiled_matmul.1} parent=1 // pred_check
      _
    $region39: #{_tiled_matmul.1} parent=1 // pred_check_branch
      %611 = sbr.rel (0) target = $region41
    $region40: #{_tiled_matmul.1} parent=1 // pred_region
      %612 = dma.done [#allocation5], 256
    $region41: #{_tiled_matmul.1} parent=1 // pred_fallthru
      _
    %613 = vsyncpa [#allocation4], 1
    %614 = vsyncpa [#allocation7], 1
    %615 = vsyncpa [#allocation5], 1

</llo_original>
